<compile_context>
chip_gen: v7x
topology: tpu7x:2x2x1
jax: 0.10.0
libtpu: 0.0.40
codegen_flags: <defaults>
</compile_context>

<pallas_src>
import numpy as np

import jax
import jax.numpy as jnp
from jax.experimental import pallas as pl
from jax.experimental.pallas import tpu as pltpu

_LANES = 128


def _scale_kernel(factor_ref, emb_ref, out_ref):
    # factor_ref: SMEM (1,) scalar parameter
    # emb_ref / out_ref: VMEM full-array block (lane-dense (rows, 128) when possible)
    out_ref[...] = emb_ref[...] * factor_ref[0]


def make_patch_bbox_pos_encoding_buffers(input_shape, scaling_ratio=128.0, dim=4,
                                         factor_ratio=1.0, num_proposals=20):
    """Mirror of the PyTorch __init__: returns (spatial_pos_embedding, bbox, factor)."""
    channels = input_shape[1]
    channels = int(np.ceil(channels / (dim * 2)) * dim)
    # NOTE: base 10 (matches the reference module: 1 / 10 ** (arange / channels)).
    inv_freq = 1.0 / 10.0 ** (np.arange(0, channels, dim, dtype=np.float32) / channels)

    x_steps = int(np.sqrt(num_proposals)) + 1
    y_steps = num_proposals // (x_steps - 1) + 1
    px = np.linspace(0.0, 128.0, num=x_steps, dtype=np.float32)
    py = np.linspace(0.0, 128.0, num=y_steps, dtype=np.float32)
    bbox_list = []
    for j in range(len(py) - 1):          # j outer over py (matches torch loop order)
        for i in range(len(px) - 1):      # i inner over px
            bbox_list.append(
                np.array([px[i], py[j], px[i + 1], py[j + 1]], dtype=np.float32))
    bbox = np.stack(bbox_list, axis=0)                         # (P, 4)

    x = bbox / np.float32(scaling_ratio)                       # (P, 4)
    pos_embed = x[..., None] * inv_freq[None, None, :]         # (P, 4, channels//dim)
    emb = np.concatenate([np.sin(pos_embed), np.cos(pos_embed)], axis=-1)
    emb = emb.reshape(emb.shape[0], -1).astype(np.float32)     # (P, 4*2*(channels//dim))

    factor = (np.ones((1,), dtype=np.float32) * np.float32(factor_ratio))
    return jnp.asarray(emb), jnp.asarray(bbox), jnp.asarray(factor)


def patch_bbox_pos_encoding_forward(spatial_pos_embedding, factor):
    """Pallas implementation of forward(): spatial_pos_embedding * factor."""
    P, E = spatial_pos_embedding.shape
    n = P * E

    # Lane-dense repack: present the kernel a (rows, 128) slab when the element
    # count allows it (20*32 = 640 = 5*128).  Wrapper-side reshape is layout
    # plumbing only; the kernel always sees a single full-array VMEM block.
    if n % _LANES == 0:
        packed = spatial_pos_embedding.reshape(n // _LANES, _LANES)
    else:
        packed = spatial_pos_embedding

    out = pl.pallas_call(
        _scale_kernel,
        out_shape=jax.ShapeDtypeStruct(packed.shape, packed.dtype),
        in_specs=[
            pl.BlockSpec(memory_space=pltpu.MemorySpace.SMEM),   # scalar parameter
            pl.BlockSpec(memory_space=pltpu.MemorySpace.VMEM),   # full embedding buffer
        ],
        out_specs=pl.BlockSpec(memory_space=pltpu.MemorySpace.VMEM),
    )(factor, packed)

    return out.reshape(P, E)


def get_bbox_list(bbox, batch_size):
    # TODO(synk): trivial Python-level replication (no kernel needed), kept for parity.
    return [bbox] * batch_size


if __name__ == "__main__":
    key = jax.random.PRNGKey(0)

    # Small, module-consistent config: input_shape[1] = 32 -> channels = 16,
    # num_proposals = 20 -> spatial_pos_embedding is (20, 32).
    input_shape = (8, 32)
    scaling_ratio = 128.0
    dim = 4
    factor_ratio = 1.0
    num_proposals = 20

    emb, bbox, factor_init = make_patch_bbox_pos_encoding_buffers(
        input_shape, scaling_ratio, dim, factor_ratio, num_proposals)

    # Simulate a (deterministic) trained value of the scalar parameter so the
    # kernel's multiply is actually exercised (init value would be exactly 1.0).
    factor = jax.random.normal(key, (1,), dtype=jnp.float32) + 1.5

    out = patch_bbox_pos_encoding_forward(emb, factor)
    out = jax.block_until_ready(out)

    # Pure-JAX reference for the forward pass.
    ref = emb * factor[0]
    assert out.shape == (num_proposals, emb.shape[1]), out.shape
    assert out.dtype == jnp.float32
    np.testing.assert_allclose(np.asarray(out), np.asarray(ref), rtol=1e-6, atol=1e-6)

    _ = get_bbox_list(bbox, batch_size=2)

    print("KERNEL_OK")
</pallas_src>

<mosaic_0001>
module attributes {stable_mosaic.version = 11 : i64} {
  func.func @_scale_kernel(%arg0: memref<1xf32, #tpu.memory_space<smem>>, %arg1: memref<5x128xf32, #tpu.memory_space<vmem>>, %arg2: memref<5x128xf32, #tpu.memory_space<vmem>>) attributes {dimension_semantics = [], scalar_prefetch = 0 : i64, scratch_operands = 0 : i64, tpu.core_type = #tpu.core_type<tc>} {
    %c0 = arith.constant 0 : index
    %c0_0 = arith.constant 0 : index
    %0 = vector.load %arg1[%c0, %c0_0] : memref<5x128xf32, #tpu.memory_space<vmem>>, vector<5x128xf32>
    %c0_1 = arith.constant 0 : index
    %1 = memref.load %arg0[%c0_1] : memref<1xf32, #tpu.memory_space<smem>>
    %2 = vector.broadcast %1 : f32 to vector<5x128xf32>
    %3 = arith.mulf %0, %2 : vector<5x128xf32>
    %c0_2 = arith.constant 0 : index
    %c0_3 = arith.constant 0 : index
    %4 = vector.load %arg2[%c0_2, %c0_3] : memref<5x128xf32, #tpu.memory_space<vmem>>, vector<5x128xf32>
    tpu.vector_store %arg2[%c0_2, %c0_3], %3 {strides = array<i32>} : memref<5x128xf32, #tpu.memory_space<vmem>>, vector<5x128xf32>,
    return
  }
}

</mosaic_0001>

<llo_original>
// kernel: tpu_custom_call.1
$region0: #{tpu_custom_call.1}
  #allocation0 [shape = 'u32[]', space=smem, size = 0x4, offset = 0x4, fixed_abs, tag = 'smem constant byte address 0x4 - core index']
  #allocation1 [shape = 'u32[144,128]{1,0:T(1,128)}', space=vmem, size = 0x12000, scoped, tag = 'internal scratch']
  #allocation2 [shape = 'f32[1]{0:T(128)S(6)}', space=smem, size = 0x200, scoped, tag = 'scoped memory for tpu_custom_call.1']
  %s0 = inlined_call_operand.<no memory space> [shape: f32[1], index: 0, kind: input, shape index: {}]
  %s1 = inlined_call_operand.hbm [shape: f32[5,128], index: 1, kind: input, shape index: {}]
  %s2 = inlined_call_operand.hbm [shape: f32[5,128], index: 2, kind: output, shape index: {}]
  %s3 = sld [smem:[#allocation0]]
  $region22: #{tpu_custom_call.1} parent=0
    _
  %s5 = ssub.s32 1, %s3
  %s6 = scalar_select 0, %s5, %s3
  %7 = sst [smem:[#allocation2]] %s0
  $region1: #{tpu_custom_call.1} parent=0
    #allocation3 [shape = 'u8[4096]{0}', space=vmem, size = 0x1000, scoped, tag = 'input window, operand 1, single buffered']
    #allocation4 [shape = 's32[1]{0}', space=sflag, size = 0x4, scoped, tag = 'scoped memory for tpu_custom_call.1']
    #allocation5 [shape = 's32[1]{0}', space=sflag, size = 0x4, scoped, tag = 'scoped memory for tpu_custom_call.1']
    #allocation6 [shape = 'u8[4096]{0}', space=vmem, size = 0x1000, scoped, tag = 'output window, operand 0, single buffered']
    %8 = vsyncpa [#allocation4], 0
    %9 = vsyncpa [#allocation5], 0
    // Predicated region
    $region2: #{tpu_custom_call.1} parent=1 // pred_check
      _
    $region3: #{tpu_custom_call.1} parent=1 // pred_check_branch
      %11 = sbr.rel (0) target = $region5
    $region4: #{tpu_custom_call.1} parent=1 // pred_region
      _
    $region5: #{tpu_custom_call.1} parent=1 // pred_fallthru
      _
    // Predicated region
    $region6: #{tpu_custom_call.1} parent=1 // pred_check
      _
    $region7: #{tpu_custom_call.1} parent=1 // pred_check_branch
      %13 = sbr.rel (0) target = $region9
    $region8: #{tpu_custom_call.1} parent=1 // pred_region
      %s15 = ssub.s32 128, 128
      %16 = vsyncadd [#allocation4], %s15
      %s18 = sshll.u32 [#allocation3], 4
      %s19 = int_to_ptr.vmem [resolvable:$true] %s18
      %21 = dma.hbm_to_vmem [thread:$0]  %s1, 128, %s19, [#allocation4]
    $region9: #{tpu_custom_call.1} parent=1 // pred_fallthru
      _
    // Predicated region
    $region10: #{tpu_custom_call.1} parent=1 // pred_check
      _
    $region11: #{tpu_custom_call.1} parent=1 // pred_check_branch
      %23 = sbr.rel (0) target = $region13
    $region12: #{tpu_custom_call.1} parent=1 // pred_region
      %24 = dma.done [#allocation4], 128
    $region13: #{tpu_custom_call.1} parent=1 // pred_fallthru
      _
    %v25 = vld [vmem:[#allocation3] sm:$0x1f]
    %s26 = sld [smem:[#allocation2]]
    %v27 = vstv %s26
    %v28 = vmul.f32 %v25, %v27
    %29 = vst [vmem:[#allocation6] sm:$0x1f] %v28
    // Predicated region
    $region14: #{tpu_custom_call.1} parent=1 // pred_check
      _
    $region15: #{tpu_custom_call.1} parent=1 // pred_check_branch
      %31 = sbr.rel (0) target = $region17
    $region16: #{tpu_custom_call.1} parent=1 // pred_region
      %s33 = ssub.s32 128, 128
      %34 = vsyncadd [#allocation5], %s33
      %s36 = sshll.u32 [#allocation6], 4
      %s37 = int_to_ptr.vmem [resolvable:$true] %s36
      %39 = dma.vmem_to_hbm [thread:$0]  %s37, 128, %s2, [#allocation5]
    $region17: #{tpu_custom_call.1} parent=1 // pred_fallthru
      _
    // Predicated region
    $region18: #{tpu_custom_call.1} parent=1 // pred_check
      _
    $region19: #{tpu_custom_call.1} parent=1 // pred_check_branch
      %41 = sbr.rel (0) target = $region21
    $region20: #{tpu_custom_call.1} parent=1 // pred_region
      %42 = dma.done [#allocation5], 128
    $region21: #{tpu_custom_call.1} parent=1 // pred_fallthru
      _
    %43 = vsyncpa [#allocation4], 1
    %44 = vsyncpa [#allocation5], 1

</llo_original>
